<compile_context>
chip_gen: v6e
topology: v6e:2x2x1
jax: 0.10.0
libtpu: 0.0.40
codegen_flags: <defaults>
</compile_context>

<pallas_src>
import jax
import jax.numpy as jnp
from jax.experimental import pallas as pl
from jax.experimental.pallas import tpu as pltpu  # noqa: F401  (TPU backend)
import numpy as np


def _lstm_encoder_kernel(x_ref,       # (T*B, D)   time-major flattened input
                         wih_ref,     # (D, 4H)    W_ih^T
                         whh_ref,     # (H, 4H)    W_hh^T
                         b_ref,       # (1, 4H)    b_ih + b_hh
                         wh_ref,      # (H, 2L)    [fc_mu.weight^T | fc_log_var.weight^T]
                         bh_ref,      # (1, 2L)    [b_mu | b_lv]
                         out_ref):    # (B, 2L)    [mu | log_var]
    B = out_ref.shape[0]
    TB, _ = x_ref.shape
    T = TB // B
    H = whh_ref.shape[0]

    whh = whh_ref[...]

    # Hoisted input projection + bias: one MXU matmul for all timesteps.
    x_proj = (jnp.dot(x_ref[...], wih_ref[...],
                      preferred_element_type=jnp.float32)
              + b_ref[...])                                   # (T*B, 4H)

    h = jnp.zeros((B, H), jnp.float32)
    c = jnp.zeros((B, H), jnp.float32)

    # Static trip count -> fully unrolled; all slices below are static.
    for t in range(T):
        gates = x_proj[t * B:(t + 1) * B, :] + jnp.dot(
            h, whh, preferred_element_type=jnp.float32)       # (B, 4H)
        # Full-vreg activations (2 EUP pushes), then static per-gate slices.
        sig = jax.nn.sigmoid(gates)
        tnh = jnp.tanh(gates)
        i_g = sig[:, 0 * H:1 * H]
        f_g = sig[:, 1 * H:2 * H]
        g_g = tnh[:, 2 * H:3 * H]
        o_g = sig[:, 3 * H:4 * H]
        c = f_g * c + i_g * g_g
        h = o_g * jnp.tanh(c)

    # Fused mu / log_var heads: single MXU matmul, lane-dense (B, 2L) store.
    out_ref[...] = (jnp.dot(h, wh_ref[...],
                            preferred_element_type=jnp.float32) + bh_ref[...])


def lstm_encoder_forward(x, params):
    """x: (B, T, D) float32.  Returns (mu, log_var), each (B, L)."""
    B, T, D = x.shape
    H = params["w_hh"].shape[1]          # w_hh: (4H, H)
    L = params["w_mu"].shape[0]          # w_mu: (L, H)

    # Time-major flatten: row t*B + b  ==  x[b, t, :].
    x_tm = jnp.transpose(x, (1, 0, 2)).reshape(T * B, D).astype(jnp.float32)

    wih_t = params["w_ih"].T                                  # (D, 4H)
    whh_t = params["w_hh"].T                                  # (H, 4H)
    b = (params["b_ih"] + params["b_hh"]).reshape(1, 4 * H)   # (1, 4H)
    w_heads = jnp.concatenate([params["w_mu"].T,
                               params["w_lv"].T], axis=1)     # (H, 2L)
    b_heads = jnp.concatenate([params["b_mu"],
                               params["b_lv"]]).reshape(1, 2 * L)

    full = lambda shape: pl.BlockSpec(shape, lambda: (0,) * len(shape))

    heads = pl.pallas_call(
        _lstm_encoder_kernel,
        out_shape=jax.ShapeDtypeStruct((B, 2 * L), jnp.float32),
        in_specs=[
            full((T * B, D)),
            full((D, 4 * H)),
            full((H, 4 * H)),
            full((1, 4 * H)),
            full((H, 2 * L)),
            full((1, 2 * L)),
        ],
        out_specs=full((B, 2 * L)),
    )(x_tm, wih_t, whh_t, b, w_heads, b_heads)

    return heads[:, :L], heads[:, L:]


def _reference_forward(x, params):
    """Pure-JAX reference matching torch.nn.LSTM + Linear heads."""
    B, T, D = x.shape
    H = params["w_hh"].shape[1]
    wih_t = params["w_ih"].T
    whh_t = params["w_hh"].T
    b = params["b_ih"] + params["b_hh"]
    h = jnp.zeros((B, H), jnp.float32)
    c = jnp.zeros((B, H), jnp.float32)
    for t in range(T):
        gates = x[:, t, :] @ wih_t + h @ whh_t + b
        i_g = jax.nn.sigmoid(gates[:, 0 * H:1 * H])
        f_g = jax.nn.sigmoid(gates[:, 1 * H:2 * H])
        g_g = jnp.tanh(gates[:, 2 * H:3 * H])
        o_g = jax.nn.sigmoid(gates[:, 3 * H:4 * H])
        c = f_g * c + i_g * g_g
        h = o_g * jnp.tanh(c)
    mu = h @ params["w_mu"].T + params["b_mu"]
    lv = h @ params["w_lv"].T + params["b_lv"]
    return mu, lv


def make_params(key, input_size, hidden_dim, latent_dim):
    """Deterministic init matching PyTorch shapes (uniform +/- 1/sqrt(H))."""
    ks = jax.random.split(key, 8)
    kH = 1.0 / jnp.sqrt(hidden_dim)
    u = lambda k, shape, s: jax.random.uniform(k, shape, jnp.float32, -s, s)
    return {
        "w_ih": u(ks[0], (4 * hidden_dim, input_size), kH),
        "w_hh": u(ks[1], (4 * hidden_dim, hidden_dim), kH),
        "b_ih": u(ks[2], (4 * hidden_dim,), kH),
        "b_hh": u(ks[3], (4 * hidden_dim,), kH),
        "w_mu": u(ks[4], (latent_dim, hidden_dim), kH),
        "b_mu": u(ks[5], (latent_dim,), kH),
        "w_lv": u(ks[6], (latent_dim, hidden_dim), kH),
        "b_lv": u(ks[7], (latent_dim,), kH),
    }


if __name__ == "__main__":
    B, T, D = 2, 8, 16          # batch, seq len, input_size
    H, L = 32, 8                # rnn_nhidden, latent_dim

    key = jax.random.PRNGKey(0)
    k_x, k_p = jax.random.split(key)
    x = jax.random.normal(k_x, (B, T, D), dtype=jnp.float32)
    params = make_params(k_p, D, H, L)

    mu, log_var = jax.block_until_ready(lstm_encoder_forward(x, params))

    mu_ref, lv_ref = _reference_forward(x, params)
    np.testing.assert_allclose(np.asarray(mu), np.asarray(mu_ref),
                               rtol=1e-4, atol=1e-5)
    np.testing.assert_allclose(np.asarray(log_var), np.asarray(lv_ref),
                               rtol=1e-4, atol=1e-5)

    print("KERNEL_OK")
</pallas_src>

<mosaic_0001>
module attributes {stable_mosaic.version = 11 : i64} {
  func.func @_lstm_encoder_kernel(%arg0: memref<16x16xf32, #tpu.memory_space<vmem>>, %arg1: memref<16x128xf32, #tpu.memory_space<vmem>>, %arg2: memref<32x128xf32, #tpu.memory_space<vmem>>, %arg3: memref<1x128xf32, #tpu.memory_space<vmem>>, %arg4: memref<32x16xf32, #tpu.memory_space<vmem>>, %arg5: memref<1x16xf32, #tpu.memory_space<vmem>>, %arg6: memref<2x16xf32, #tpu.memory_space<vmem>>) attributes {dimension_semantics = [], scalar_prefetch = 0 : i64, scratch_operands = 0 : i64, tpu.core_type = #tpu.core_type<tc>} {
    %c0 = arith.constant 0 : index
    %c0_0 = arith.constant 0 : index
    %0 = vector.load %arg2[%c0, %c0_0] : memref<32x128xf32, #tpu.memory_space<vmem>>, vector<32x128xf32>
    %c0_1 = arith.constant 0 : index
    %c0_2 = arith.constant 0 : index
    %1 = vector.load %arg0[%c0_1, %c0_2] : memref<16x16xf32, #tpu.memory_space<vmem>>, vector<16x16xf32>
    %c0_3 = arith.constant 0 : index
    %c0_4 = arith.constant 0 : index
    %2 = vector.load %arg1[%c0_3, %c0_4] : memref<16x128xf32, #tpu.memory_space<vmem>>, vector<16x128xf32>
    %cst = arith.constant dense<0.000000e+00> : vector<16x128xf32>
    %3 = tpu.matmul %1, %2, %cst {dimension_numbers = #tpu.dot_dimension_numbers<[1], [0], [0], [1], [0, 0, 1, 1], [], []>} : vector<16x16xf32>, vector<16x128xf32>, vector<16x128xf32> -> vector<16x128xf32>
    %c0_5 = arith.constant 0 : index
    %c0_6 = arith.constant 0 : index
    %4 = vector.load %arg3[%c0_5, %c0_6] : memref<1x128xf32, #tpu.memory_space<vmem>>, vector<1x128xf32>
    %5 = vector.broadcast %4 : vector<1x128xf32> to vector<16x128xf32>
    %6 = arith.addf %3, %5 : vector<16x128xf32>
    %cst_7 = arith.constant 0.000000e+00 : f32
    %7 = vector.broadcast %cst_7 : f32 to vector<2x32xf32>
    %cst_8 = arith.constant 0.000000e+00 : f32
    %8 = vector.broadcast %cst_8 : f32 to vector<2x32xf32>
    %9 = vector.extract_strided_slice %6 {offsets = [0, 0], sizes = [2, 128], strides = [1, 1]} : vector<16x128xf32> to vector<2x128xf32>
    %cst_9 = arith.constant dense<0.000000e+00> : vector<2x128xf32>
    %10 = tpu.matmul %7, %0, %cst_9 {dimension_numbers = #tpu.dot_dimension_numbers<[1], [0], [0], [1], [0, 0, 1, 1], [], []>} : vector<2x32xf32>, vector<32x128xf32>, vector<2x128xf32> -> vector<2x128xf32>
    %11 = arith.addf %9, %10 : vector<2x128xf32>
    %12 = arith.negf %11 : vector<2x128xf32>
    %13 = math.exp %12 : vector<2x128xf32>
    %cst_10 = arith.constant 1.000000e+00 : f32
    %14 = vector.broadcast %cst_10 : f32 to vector<2x128xf32>
    %15 = arith.addf %14, %13 : vector<2x128xf32>
    %16 = arith.divf %14, %15 : vector<2x128xf32>
    %17 = math.tanh %11 : vector<2x128xf32>
    %18 = vector.extract_strided_slice %16 {offsets = [0, 0], sizes = [2, 32], strides = [1, 1]} : vector<2x128xf32> to vector<2x32xf32>
    %19 = vector.extract_strided_slice %16 {offsets = [0, 32], sizes = [2, 32], strides = [1, 1]} : vector<2x128xf32> to vector<2x32xf32>
    %20 = vector.extract_strided_slice %17 {offsets = [0, 64], sizes = [2, 32], strides = [1, 1]} : vector<2x128xf32> to vector<2x32xf32>
    %21 = vector.extract_strided_slice %16 {offsets = [0, 96], sizes = [2, 32], strides = [1, 1]} : vector<2x128xf32> to vector<2x32xf32>
    %22 = arith.mulf %19, %8 : vector<2x32xf32>
    %23 = arith.mulf %18, %20 : vector<2x32xf32>
    %24 = arith.addf %22, %23 : vector<2x32xf32>
    %25 = math.tanh %24 : vector<2x32xf32>
    %26 = arith.mulf %21, %25 : vector<2x32xf32>
    %27 = vector.extract_strided_slice %6 {offsets = [2, 0], sizes = [2, 128], strides = [1, 1]} : vector<16x128xf32> to vector<2x128xf32>
    %cst_11 = arith.constant dense<0.000000e+00> : vector<2x128xf32>
    %28 = tpu.matmul %26, %0, %cst_11 {dimension_numbers = #tpu.dot_dimension_numbers<[1], [0], [0], [1], [0, 0, 1, 1], [], []>} : vector<2x32xf32>, vector<32x128xf32>, vector<2x128xf32> -> vector<2x128xf32>
    %29 = arith.addf %27, %28 : vector<2x128xf32>
    %30 = arith.negf %29 : vector<2x128xf32>
    %31 = math.exp %30 : vector<2x128xf32>
    %cst_12 = arith.constant 1.000000e+00 : f32
    %32 = vector.broadcast %cst_12 : f32 to vector<2x128xf32>
    %33 = arith.addf %32, %31 : vector<2x128xf32>
    %34 = arith.divf %32, %33 : vector<2x128xf32>
    %35 = math.tanh %29 : vector<2x128xf32>
    %36 = vector.extract_strided_slice %34 {offsets = [0, 0], sizes = [2, 32], strides = [1, 1]} : vector<2x128xf32> to vector<2x32xf32>
    %37 = vector.extract_strided_slice %34 {offsets = [0, 32], sizes = [2, 32], strides = [1, 1]} : vector<2x128xf32> to vector<2x32xf32>
    %38 = vector.extract_strided_slice %35 {offsets = [0, 64], sizes = [2, 32], strides = [1, 1]} : vector<2x128xf32> to vector<2x32xf32>
    %39 = vector.extract_strided_slice %34 {offsets = [0, 96], sizes = [2, 32], strides = [1, 1]} : vector<2x128xf32> to vector<2x32xf32>
    %40 = arith.mulf %37, %24 : vector<2x32xf32>
    %41 = arith.mulf %36, %38 : vector<2x32xf32>
    %42 = arith.addf %40, %41 : vector<2x32xf32>
    %43 = math.tanh %42 : vector<2x32xf32>
    %44 = arith.mulf %39, %43 : vector<2x32xf32>
    %45 = vector.extract_strided_slice %6 {offsets = [4, 0], sizes = [2, 128], strides = [1, 1]} : vector<16x128xf32> to vector<2x128xf32>
    %cst_13 = arith.constant dense<0.000000e+00> : vector<2x128xf32>
    %46 = tpu.matmul %44, %0, %cst_13 {dimension_numbers = #tpu.dot_dimension_numbers<[1], [0], [0], [1], [0, 0, 1, 1], [], []>} : vector<2x32xf32>, vector<32x128xf32>, vector<2x128xf32> -> vector<2x128xf32>
    %47 = arith.addf %45, %46 : vector<2x128xf32>
    %48 = arith.negf %47 : vector<2x128xf32>
    %49 = math.exp %48 : vector<2x128xf32>
    %cst_14 = arith.constant 1.000000e+00 : f32
    %50 = vector.broadcast %cst_14 : f32 to vector<2x128xf32>
    %51 = arith.addf %50, %49 : vector<2x128xf32>
    %52 = arith.divf %50, %51 : vector<2x128xf32>
    %53 = math.tanh %47 : vector<2x128xf32>
    %54 = vector.extract_strided_slice %52 {offsets = [0, 0], sizes = [2, 32], strides = [1, 1]} : vector<2x128xf32> to vector<2x32xf32>
    %55 = vector.extract_strided_slice %52 {offsets = [0, 32], sizes = [2, 32], strides = [1, 1]} : vector<2x128xf32> to vector<2x32xf32>
    %56 = vector.extract_strided_slice %53 {offsets = [0, 64], sizes = [2, 32], strides = [1, 1]} : vector<2x128xf32> to vector<2x32xf32>
    %57 = vector.extract_strided_slice %52 {offsets = [0, 96], sizes = [2, 32], strides = [1, 1]} : vector<2x128xf32> to vector<2x32xf32>
    %58 = arith.mulf %55, %42 : vector<2x32xf32>
    %59 = arith.mulf %54, %56 : vector<2x32xf32>
    %60 = arith.addf %58, %59 : vector<2x32xf32>
    %61 = math.tanh %60 : vector<2x32xf32>
    %62 = arith.mulf %57, %61 : vector<2x32xf32>
    %63 = vector.extract_strided_slice %6 {offsets = [6, 0], sizes = [2, 128], strides = [1, 1]} : vector<16x128xf32> to vector<2x128xf32>
    %cst_15 = arith.constant dense<0.000000e+00> : vector<2x128xf32>
    %64 = tpu.matmul %62, %0, %cst_15 {dimension_numbers = #tpu.dot_dimension_numbers<[1], [0], [0], [1], [0, 0, 1, 1], [], []>} : vector<2x32xf32>, vector<32x128xf32>, vector<2x128xf32> -> vector<2x128xf32>
    %65 = arith.addf %63, %64 : vector<2x128xf32>
    %66 = arith.negf %65 : vector<2x128xf32>
    %67 = math.exp %66 : vector<2x128xf32>
    %cst_16 = arith.constant 1.000000e+00 : f32
    %68 = vector.broadcast %cst_16 : f32 to vector<2x128xf32>
    %69 = arith.addf %68, %67 : vector<2x128xf32>
    %70 = arith.divf %68, %69 : vector<2x128xf32>
    %71 = math.tanh %65 : vector<2x128xf32>
    %72 = vector.extract_strided_slice %70 {offsets = [0, 0], sizes = [2, 32], strides = [1, 1]} : vector<2x128xf32> to vector<2x32xf32>
    %73 = vector.extract_strided_slice %70 {offsets = [0, 32], sizes = [2, 32], strides = [1, 1]} : vector<2x128xf32> to vector<2x32xf32>
    %74 = vector.extract_strided_slice %71 {offsets = [0, 64], sizes = [2, 32], strides = [1, 1]} : vector<2x128xf32> to vector<2x32xf32>
    %75 = vector.extract_strided_slice %70 {offsets = [0, 96], sizes = [2, 32], strides = [1, 1]} : vector<2x128xf32> to vector<2x32xf32>
    %76 = arith.mulf %73, %60 : vector<2x32xf32>
    %77 = arith.mulf %72, %74 : vector<2x32xf32>
    %78 = arith.addf %76, %77 : vector<2x32xf32>
    %79 = math.tanh %78 : vector<2x32xf32>
    %80 = arith.mulf %75, %79 : vector<2x32xf32>
    %81 = vector.extract_strided_slice %6 {offsets = [8, 0], sizes = [2, 128], strides = [1, 1]} : vector<16x128xf32> to vector<2x128xf32>
    %cst_17 = arith.constant dense<0.000000e+00> : vector<2x128xf32>
    %82 = tpu.matmul %80, %0, %cst_17 {dimension_numbers = #tpu.dot_dimension_numbers<[1], [0], [0], [1], [0, 0, 1, 1], [], []>} : vector<2x32xf32>, vector<32x128xf32>, vector<2x128xf32> -> vector<2x128xf32>
    %83 = arith.addf %81, %82 : vector<2x128xf32>
    %84 = arith.negf %83 : vector<2x128xf32>
    %85 = math.exp %84 : vector<2x128xf32>
    %cst_18 = arith.constant 1.000000e+00 : f32
    %86 = vector.broadcast %cst_18 : f32 to vector<2x128xf32>
    %87 = arith.addf %86, %85 : vector<2x128xf32>
    %88 = arith.divf %86, %87 : vector<2x128xf32>
    %89 = math.tanh %83 : vector<2x128xf32>
    %90 = vector.extract_strided_slice %88 {offsets = [0, 0], sizes = [2, 32], strides = [1, 1]} : vector<2x128xf32> to vector<2x32xf32>
    %91 = vector.extract_strided_slice %88 {offsets = [0, 32], sizes = [2, 32], strides = [1, 1]} : vector<2x128xf32> to vector<2x32xf32>
    %92 = vector.extract_strided_slice %89 {offsets = [0, 64], sizes = [2, 32], strides = [1, 1]} : vector<2x128xf32> to vector<2x32xf32>
    %93 = vector.extract_strided_slice %88 {offsets = [0, 96], sizes = [2, 32], strides = [1, 1]} : vector<2x128xf32> to vector<2x32xf32>
    %94 = arith.mulf %91, %78 : vector<2x32xf32>
    %95 = arith.mulf %90, %92 : vector<2x32xf32>
    %96 = arith.addf %94, %95 : vector<2x32xf32>
    %97 = math.tanh %96 : vector<2x32xf32>
    %98 = arith.mulf %93, %97 : vector<2x32xf32>
    %99 = vector.extract_strided_slice %6 {offsets = [10, 0], sizes = [2, 128], strides = [1, 1]} : vector<16x128xf32> to vector<2x128xf32>
    %cst_19 = arith.constant dense<0.000000e+00> : vector<2x128xf32>
    %100 = tpu.matmul %98, %0, %cst_19 {dimension_numbers = #tpu.dot_dimension_numbers<[1], [0], [0], [1], [0, 0, 1, 1], [], []>} : vector<2x32xf32>, vector<32x128xf32>, vector<2x128xf32> -> vector<2x128xf32>
    %101 = arith.addf %99, %100 : vector<2x128xf32>
    %102 = arith.negf %101 : vector<2x128xf32>
    %103 = math.exp %102 : vector<2x128xf32>
    %cst_20 = arith.constant 1.000000e+00 : f32
    %104 = vector.broadcast %cst_20 : f32 to vector<2x128xf32>
    %105 = arith.addf %104, %103 : vector<2x128xf32>
    %106 = arith.divf %104, %105 : vector<2x128xf32>
    %107 = math.tanh %101 : vector<2x128xf32>
    %108 = vector.extract_strided_slice %106 {offsets = [0, 0], sizes = [2, 32], strides = [1, 1]} : vector<2x128xf32> to vector<2x32xf32>
    %109 = vector.extract_strided_slice %106 {offsets = [0, 32], sizes = [2, 32], strides = [1, 1]} : vector<2x128xf32> to vector<2x32xf32>
    %110 = vector.extract_strided_slice %107 {offsets = [0, 64], sizes = [2, 32], strides = [1, 1]} : vector<2x128xf32> to vector<2x32xf32>
    %111 = vector.extract_strided_slice %106 {offsets = [0, 96], sizes = [2, 32], strides = [1, 1]} : vector<2x128xf32> to vector<2x32xf32>
    %112 = arith.mulf %109, %96 : vector<2x32xf32>
    %113 = arith.mulf %108, %110 : vector<2x32xf32>
    %114 = arith.addf %112, %113 : vector<2x32xf32>
    %115 = math.tanh %114 : vector<2x32xf32>
    %116 = arith.mulf %111, %115 : vector<2x32xf32>
    %117 = vector.extract_strided_slice %6 {offsets = [12, 0], sizes = [2, 128], strides = [1, 1]} : vector<16x128xf32> to vector<2x128xf32>
    %cst_21 = arith.constant dense<0.000000e+00> : vector<2x128xf32>
    %118 = tpu.matmul %116, %0, %cst_21 {dimension_numbers = #tpu.dot_dimension_numbers<[1], [0], [0], [1], [0, 0, 1, 1], [], []>} : vector<2x32xf32>, vector<32x128xf32>, vector<2x128xf32> -> vector<2x128xf32>
    %119 = arith.addf %117, %118 : vector<2x128xf32>
    %120 = arith.negf %119 : vector<2x128xf32>
    %121 = math.exp %120 : vector<2x128xf32>
    %cst_22 = arith.constant 1.000000e+00 : f32
    %122 = vector.broadcast %cst_22 : f32 to vector<2x128xf32>
    %123 = arith.addf %122, %121 : vector<2x128xf32>
    %124 = arith.divf %122, %123 : vector<2x128xf32>
    %125 = math.tanh %119 : vector<2x128xf32>
    %126 = vector.extract_strided_slice %124 {offsets = [0, 0], sizes = [2, 32], strides = [1, 1]} : vector<2x128xf32> to vector<2x32xf32>
    %127 = vector.extract_strided_slice %124 {offsets = [0, 32], sizes = [2, 32], strides = [1, 1]} : vector<2x128xf32> to vector<2x32xf32>
    %128 = vector.extract_strided_slice %125 {offsets = [0, 64], sizes = [2, 32], strides = [1, 1]} : vector<2x128xf32> to vector<2x32xf32>
    %129 = vector.extract_strided_slice %124 {offsets = [0, 96], sizes = [2, 32], strides = [1, 1]} : vector<2x128xf32> to vector<2x32xf32>
    %130 = arith.mulf %127, %114 : vector<2x32xf32>
    %131 = arith.mulf %126, %128 : vector<2x32xf32>
    %132 = arith.addf %130, %131 : vector<2x32xf32>
    %133 = math.tanh %132 : vector<2x32xf32>
    %134 = arith.mulf %129, %133 : vector<2x32xf32>
    %135 = vector.extract_strided_slice %6 {offsets = [14, 0], sizes = [2, 128], strides = [1, 1]} : vector<16x128xf32> to vector<2x128xf32>
    %cst_23 = arith.constant dense<0.000000e+00> : vector<2x128xf32>
    %136 = tpu.matmul %134, %0, %cst_23 {dimension_numbers = #tpu.dot_dimension_numbers<[1], [0], [0], [1], [0, 0, 1, 1], [], []>} : vector<2x32xf32>, vector<32x128xf32>, vector<2x128xf32> -> vector<2x128xf32>
    %137 = arith.addf %135, %136 : vector<2x128xf32>
    %138 = arith.negf %137 : vector<2x128xf32>
    %139 = math.exp %138 : vector<2x128xf32>
    %cst_24 = arith.constant 1.000000e+00 : f32
    %140 = vector.broadcast %cst_24 : f32 to vector<2x128xf32>
    %141 = arith.addf %140, %139 : vector<2x128xf32>
    %142 = arith.divf %140, %141 : vector<2x128xf32>
    %143 = math.tanh %137 : vector<2x128xf32>
    %144 = vector.extract_strided_slice %142 {offsets = [0, 0], sizes = [2, 32], strides = [1, 1]} : vector<2x128xf32> to vector<2x32xf32>
    %145 = vector.extract_strided_slice %142 {offsets = [0, 32], sizes = [2, 32], strides = [1, 1]} : vector<2x128xf32> to vector<2x32xf32>
    %146 = vector.extract_strided_slice %143 {offsets = [0, 64], sizes = [2, 32], strides = [1, 1]} : vector<2x128xf32> to vector<2x32xf32>
    %147 = vector.extract_strided_slice %142 {offsets = [0, 96], sizes = [2, 32], strides = [1, 1]} : vector<2x128xf32> to vector<2x32xf32>
    %148 = arith.mulf %145, %132 : vector<2x32xf32>
    %149 = arith.mulf %144, %146 : vector<2x32xf32>
    %150 = arith.addf %148, %149 : vector<2x32xf32>
    %151 = math.tanh %150 : vector<2x32xf32>
    %152 = arith.mulf %147, %151 : vector<2x32xf32>
    %c0_25 = arith.constant 0 : index
    %c0_26 = arith.constant 0 : index
    %153 = vector.load %arg4[%c0_25, %c0_26] : memref<32x16xf32, #tpu.memory_space<vmem>>, vector<32x16xf32>
    %cst_27 = arith.constant dense<0.000000e+00> : vector<2x16xf32>
    %154 = tpu.matmul %152, %153, %cst_27 {dimension_numbers = #tpu.dot_dimension_numbers<[1], [0], [0], [1], [0, 0, 1, 1], [], []>} : vector<2x32xf32>, vector<32x16xf32>, vector<2x16xf32> -> vector<2x16xf32>
    %c0_28 = arith.constant 0 : index
    %c0_29 = arith.constant 0 : index
    %155 = vector.load %arg5[%c0_28, %c0_29] : memref<1x16xf32, #tpu.memory_space<vmem>>, vector<1x16xf32>
    %156 = vector.broadcast %155 : vector<1x16xf32> to vector<2x16xf32>
    %157 = arith.addf %154, %156 : vector<2x16xf32>
    %c0_30 = arith.constant 0 : index
    %c0_31 = arith.constant 0 : index
    %158 = vector.load %arg6[%c0_30, %c0_31] : memref<2x16xf32, #tpu.memory_space<vmem>>, vector<2x16xf32>
    tpu.vector_store %arg6[%c0_30, %c0_31], %157 {strides = array<i32>} : memref<2x16xf32, #tpu.memory_space<vmem>>, vector<2x16xf32>,
    return
  }
}

</mosaic_0001>

<llo_original>
// kernel: tpu_custom_call.1
$region0: #{tpu_custom_call.1}
  #allocation0 [shape = 'u32[]', space=smem, size = 0x4, offset = 0x4, fixed_abs, tag = 'smem constant byte address 0x4 - core index']
  #allocation1 [shape = 'u32[144,128]{1,0:T(1,128)}', space=vmem, size = 0x12000, scoped, tag = 'internal scratch']
  %s0 = inlined_call_operand.vmem [shape: f32[16,16], index: 0, kind: input, shape index: {}]
  %s1 = inlined_call_operand.hbm [shape: f32[16,128], index: 1, kind: input, shape index: {}]
  %s2 = inlined_call_operand.vmem [shape: f32[32,128], index: 2, kind: input, shape index: {}]
  %s3 = inlined_call_operand.vmem [shape: f32[1,128], index: 3, kind: input, shape index: {}]
  %s4 = inlined_call_operand.vmem [shape: f32[32,16], index: 4, kind: input, shape index: {}]
  %s5 = inlined_call_operand.vmem [shape: f32[1,16], index: 5, kind: input, shape index: {}]
  %s6 = inlined_call_operand.hbm [shape: f32[2,16], index: 6, kind: output, shape index: {}]
  %s7 = sld [smem:[#allocation0]]
  $region38: #{tpu_custom_call.1} parent=0
    _
  %s9 = ssub.s32 1, %s7
  %s10 = scalar_select 0, %s9, %s7
  $region1: #{tpu_custom_call.1} parent=0
    #allocation2 [shape = 'u8[8192]{0}', space=vmem, size = 0x2000, scoped, tag = 'input window, operand 1, single buffered']
    #allocation3 [shape = 's32[1]{0}', space=sflag, size = 0x4, scoped, tag = 'scoped memory for tpu_custom_call.1']
    #allocation4 [shape = 's32[1]{0}', space=sflag, size = 0x4, scoped, tag = 'scoped memory for tpu_custom_call.1']
    #allocation5 [shape = 'u8[1024]{0}', space=vmem, size = 0x400, scoped, tag = 'output window, operand 0, single buffered']
    %11 = vsyncpa [#allocation3], 0
    %12 = vsyncpa [#allocation4], 0
    // Predicated region
    $region2: #{tpu_custom_call.1} parent=1 // pred_check
      _
    $region3: #{tpu_custom_call.1} parent=1 // pred_check_branch
      %14 = sbr.rel (0) target = $region5
    $region4: #{tpu_custom_call.1} parent=1 // pred_region
      _
    $region5: #{tpu_custom_call.1} parent=1 // pred_fallthru
      _
    // Predicated region
    $region6: #{tpu_custom_call.1} parent=1 // pred_check
      _
    $region7: #{tpu_custom_call.1} parent=1 // pred_check_branch
      %16 = sbr.rel (0) target = $region9
    $region8: #{tpu_custom_call.1} parent=1 // pred_region
      %s18 = ssub.s32 256, 256
      %19 = vsyncadd [#allocation3], %s18
      %s20 = sshll.u32 [#allocation2], 4
      %s21 = int_to_ptr.vmem [resolvable:$true] %s20
      %26 = dma.hbm_to_vmem [thread:$0]  %s1, 256, %s21, [#allocation3], 128, 128, 8
    $region9: #{tpu_custom_call.1} parent=1 // pred_fallthru
      _
    // Predicated region
    $region10: #{tpu_custom_call.1} parent=1 // pred_check
      _
    $region11: #{tpu_custom_call.1} parent=1 // pred_check_branch
      %28 = sbr.rel (0) target = $region13
    $region12: #{tpu_custom_call.1} parent=1 // pred_region
      _
    $region13: #{tpu_custom_call.1} parent=1 // pred_fallthru
      _
    // Predicated region
    $region14: #{tpu_custom_call.1} parent=1 // pred_check
      _
    $region15: #{tpu_custom_call.1} parent=1 // pred_check_branch
      %30 = sbr.rel (0) target = $region17
    $region16: #{tpu_custom_call.1} parent=1 // pred_region
      _
    $region17: #{tpu_custom_call.1} parent=1 // pred_fallthru
      _
    // Predicated region
    $region18: #{tpu_custom_call.1} parent=1 // pred_check
      _
    $region19: #{tpu_custom_call.1} parent=1 // pred_check_branch
      %32 = sbr.rel (0) target = $region21
    $region20: #{tpu_custom_call.1} parent=1 // pred_region
      _
    $region21: #{tpu_custom_call.1} parent=1 // pred_fallthru
      _
    // Predicated region
    $region22: #{tpu_custom_call.1} parent=1 // pred_check
      _
    $region23: #{tpu_custom_call.1} parent=1 // pred_check_branch
      %34 = sbr.rel (0) target = $region25
    $region24: #{tpu_custom_call.1} parent=1 // pred_region
      _
    $region25: #{tpu_custom_call.1} parent=1 // pred_fallthru
      _
    // Predicated region
    $region26: #{tpu_custom_call.1} parent=1 // pred_check
      _
    $region27: #{tpu_custom_call.1} parent=1 // pred_check_branch
      %36 = sbr.rel (0) target = $region29
    $region28: #{tpu_custom_call.1} parent=1 // pred_region
      %37 = dma.done [#allocation3], 256
    $region29: #{tpu_custom_call.1} parent=1 // pred_fallthru
      _
    %v38 = vld [vmem:[%s2] sm:$0xff]
    %v39 = vld [vmem:[%s2 + $0x8] sm:$0xff]
    %v40 = vld [vmem:[%s2 + $0x10] sm:$0xff]
    %v41 = vld [vmem:[%s2 + $0x18] sm:$0xff]
    %v42 = vld [vmem:[%s0] sm:$0xff]
    %v43 = vld [vmem:[%s0 + $0x8] sm:$0xff]
    %v44 = vld [vmem:[#allocation2] sm:$0xff]
    %v45 = vld [vmem:[#allocation2 + $0x8] sm:$0xff]
    %v46 = vld [vmem:[%s3] sm:$0x1]
    %v48 = vlaneseq
    %v49 = vshrl.u32 %v48, 7
    %v50 = vsub.s32 0, %v49
    %v51 = vrot.slane %v46, %v50
    %vm53 = vcmask 130048
    %v55 = vsel %vm53, %v42, 0
    %v58 = vsel %vm53, %v43, 0
    %60 = vmatprep.subr.mxu0 0.0
    %61 = vmatpush1.msra.mxu0 0.0
    %62 = vmatprep.subr.mxu0 0.0
    %63 = vmatpush1.msra.mxu0 0.0
    %64 = vmatprep.subr.mxu0 0.0
    %65 = vmatpush1.msra.mxu0 0.0
    %66 = vmatprep.subr.mxu0 0.0
    %67 = vmatpush1.msra.mxu0 0.0
    %68 = vmatprep.subr.mxu0 0.0
    %69 = vmatpush1.msra.mxu0 0.0
    %70 = vmatprep.subr.mxu0 0.0
    %71 = vmatpush1.msra.mxu0 0.0
    %72 = vmatprep.subr.mxu0 0.0
    %73 = vmatpush1.msra.mxu0 0.0
    %74 = vmatprep.subr.mxu0 0.0
    %75 = vmatpush1.msra.mxu0 0.0
    %76 = vmatprep.subr.mxu0 0.0
    %77 = vmatpush1.msra.mxu0 0.0
    %78 = vmatprep.subr.mxu0 0.0
    %79 = vmatpush1.msra.mxu0 0.0
    %80 = vmatprep.subr.mxu0 0.0
    %81 = vmatpush1.msra.mxu0 0.0
    %82 = vmatprep.subr.mxu0 0.0
    %83 = vmatpush1.msra.mxu0 0.0
    %84 = vmatprep.subr.mxu0 0.0
    %85 = vmatpush1.msra.mxu0 0.0
    %86 = vmatprep.subr.mxu0 0.0
    %87 = vmatpush1.msra.mxu0 0.0
    %88 = vmatprep.subr.mxu0 0.0
    %89 = vmatpush1.msra.mxu0 %v45
    %90 = vmatprep.subr.mxu0 0.0
    %91 = vmatpush1.msra.mxu0 %v44
    %92 = vmatprep.subr.mxu0 0.0
    %93 = vmatpush2.msra.mxu0 0.0
    %94 = vmatprep.subr.mxu0 0.0
    %95 = vmatpush2.msra.mxu0 0.0
    %96 = vmatprep.subr.mxu0 0.0
    %97 = vmatpush2.msra.mxu0 0.0
    %98 = vmatprep.subr.mxu0 0.0
    %99 = vmatpush2.msra.mxu0 0.0
    %100 = vmatprep.subr.mxu0 0.0
    %101 = vmatpush2.msra.mxu0 0.0
    %102 = vmatprep.subr.mxu0 0.0
    %103 = vmatpush2.msra.mxu0 0.0
    %104 = vmatprep.subr.mxu0 0.0
    %105 = vmatpush2.msra.mxu0 0.0
    %106 = vmatprep.subr.mxu0 0.0
    %107 = vmatpush2.msra.mxu0 0.0
    %108 = vmatprep.subr.mxu0 0.0
    %109 = vmatpush2.msra.mxu0 0.0
    %110 = vmatprep.subr.mxu0 0.0
    %111 = vmatpush2.msra.mxu0 0.0
    %112 = vmatprep.subr.mxu0 0.0
    %113 = vmatpush2.msra.mxu0 0.0
    %114 = vmatprep.subr.mxu0 0.0
    %115 = vmatpush2.msra.mxu0 0.0
    %116 = vmatprep.subr.mxu0 0.0
    %117 = vmatpush2.msra.mxu0 0.0
    %118 = vmatprep.subr.mxu0 0.0
    %119 = vmatpush2.msra.mxu0 0.0
    %120 = vmatprep.subr.mxu0 0.0
    %121 = vmatpush2.msra.mxu0 0.0
    %122 = vmatprep.subr.mxu0 0.0
    %123 = vmatpush2.msra.mxu0 0.0
    %124 = vmatprep.mubr.f32.mxu0 0.0
    %125 = vmatmul.mubr.f32.gmra.mxu0 %v55
    %v126 = vpop.f32.mrf.mxu0
    %v127 = vadd.f32 %v51, %v126
    %v128 = vpop.f32.mrf.mxu0
    %129 = vmatprep.mubr.f32.mxu0 0.0
    %130 = vmatmul.mubr.f32.gmra.mxu0 %v58
    %v131 = vpop.f32.mrf.mxu0
    %v132 = vadd.f32 %v51, %v131
    %v133 = vpop.f32.mrf.mxu0
    %134 = vdwg.mxu0
    %vm135 = vcmask 261120
    %v137 = vsel %vm135, 0.0, 0
    %139 = vmatprep.subr.mxu0 0.0
    %140 = vmatpush1.msra.mxu0 0.0
    %141 = vmatprep.subr.mxu0 0.0
    %142 = vmatpush1.msra.mxu0 0.0
    %143 = vmatprep.subr.mxu0 0.0
    %144 = vmatpush1.msra.mxu0 0.0
    %145 = vmatprep.subr.mxu0 0.0
    %146 = vmatpush1.msra.mxu0 0.0
    %147 = vmatprep.subr.mxu0 0.0
    %148 = vmatpush1.msra.mxu0 0.0
    %149 = vmatprep.subr.mxu0 0.0
    %150 = vmatpush1.msra.mxu0 0.0
    %151 = vmatprep.subr.mxu0 0.0
    %152 = vmatpush1.msra.mxu0 0.0
    %153 = vmatprep.subr.mxu0 0.0
    %154 = vmatpush1.msra.mxu0 0.0
    %155 = vmatprep.subr.mxu0 0.0
    %156 = vmatpush1.msra.mxu0 0.0
    %157 = vmatprep.subr.mxu0 0.0
    %158 = vmatpush1.msra.mxu0 0.0
    %159 = vmatprep.subr.mxu0 0.0
    %160 = vmatpush1.msra.mxu0 0.0
    %161 = vmatprep.subr.mxu0 0.0
    %162 = vmatpush1.msra.mxu0 0.0
    %163 = vmatprep.subr.mxu0 0.0
    %164 = vmatpush1.msra.mxu0 %v41
    %165 = vmatprep.subr.mxu0 0.0
    %166 = vmatpush1.msra.mxu0 %v40
    %167 = vmatprep.subr.mxu0 0.0
    %168 = vmatpush1.msra.mxu0 %v39
    %169 = vmatprep.subr.mxu0 0.0
    %170 = vmatpush1.msra.mxu0 %v38
    %171 = vmatprep.subr.mxu0 0.0
    %172 = vmatpush2.msra.mxu0 0.0
    %173 = vmatprep.subr.mxu0 0.0
    %174 = vmatpush2.msra.mxu0 0.0
    %175 = vmatprep.subr.mxu0 0.0
    %176 = vmatpush2.msra.mxu0 0.0
    %177 = vmatprep.subr.mxu0 0.0
    %178 = vmatpush2.msra.mxu0 0.0
    %179 = vmatprep.subr.mxu0 0.0
    %180 = vmatpush2.msra.mxu0 0.0
    %181 = vmatprep.subr.mxu0 0.0
    %182 = vmatpush2.msra.mxu0 0.0
    %183 = vmatprep.subr.mxu0 0.0
    %184 = vmatpush2.msra.mxu0 0.0
    %185 = vmatprep.subr.mxu0 0.0
    %186 = vmatpush2.msra.mxu0 0.0
    %187 = vmatprep.subr.mxu0 0.0
    %188 = vmatpush2.msra.mxu0 0.0
    %189 = vmatprep.subr.mxu0 0.0
    %190 = vmatpush2.msra.mxu0 0.0
    %191 = vmatprep.subr.mxu0 0.0
    %192 = vmatpush2.msra.mxu0 0.0
    %193 = vmatprep.subr.mxu0 0.0
    %194 = vmatpush2.msra.mxu0 0.0
    %195 = vmatprep.subr.mxu0 0.0
    %196 = vmatpush2.msra.mxu0 0.0
    %197 = vmatprep.subr.mxu0 0.0
    %198 = vmatpush2.msra.mxu0 0.0
    %199 = vmatprep.subr.mxu0 0.0
    %200 = vmatpush2.msra.mxu0 0.0
    %201 = vmatprep.subr.mxu0 0.0
    %202 = vmatpush2.msra.mxu0 0.0
    %203 = vmatprep.mubr.f32.mxu0 0.0
    %204 = vmatmul.mubr.f32.gmra.mxu0 %v137
    %v205 = vpop.f32.mrf.mxu0
    %v206 = vadd.f32 0.0, %v205
    %v207 = vpop.f32.mrf.mxu0
    %208 = vdwg.mxu0
    %v209 = vadd.f32 %v127, %v206
    %v210 = vxor.u32 %v209, 2147483648
    %v211 = vmul.f32 %v210, 1.442695
    %v212 = vpow.pop %v211
    %v213 = vadd.f32 %v212, 1.0
    %v214 = vrcp.pop %v213
    %v215 = vmul.f32 1.0, %v214
    %v216 = vtanh.pop %v209
    %v217 = vmul.f32 %v215, 0.0
    %219 = vrot.lane.b32.xlu0 %v216, 64
    %v220 = vpop.permute.xlu0 %219
    %v222 = vmul.f32 %v215, %v220
    %224 = vrot.lane.b32.xlu0 %v222, 32
    %v225 = vpop.permute.xlu0 %224
    %v227 = vadd.f32 %v217, %v225
    %v228 = vtanh.pop %v227
    %230 = vrot.lane.b32.xlu0 %v228, 64
    %v231 = vpop.permute.xlu0 %230
    %v233 = vmul.f32 %v215, %v231
    %235 = vrot.lane.b32.xlu0 %v233, 32
    %v236 = vpop.permute.xlu0 %235
    %v237 = vsel %vm135, %v236, 0
    %239 = vmatprep.subr.mxu0 0.0
    %240 = vmatpush1.msra.mxu0 0.0
    %241 = vmatprep.subr.mxu0 0.0
    %242 = vmatpush1.msra.mxu0 0.0
    %243 = vmatprep.subr.mxu0 0.0
    %244 = vmatpush1.msra.mxu0 0.0
    %245 = vmatprep.subr.mxu0 0.0
    %246 = vmatpush1.msra.mxu0 0.0
    %247 = vmatprep.subr.mxu0 0.0
    %248 = vmatpush1.msra.mxu0 0.0
    %249 = vmatprep.subr.mxu0 0.0
    %250 = vmatpush1.msra.mxu0 0.0
    %251 = vmatprep.subr.mxu0 0.0
    %252 = vmatpush1.msra.mxu0 0.0
    %253 = vmatprep.subr.mxu0 0.0
    %254 = vmatpush1.msra.mxu0 0.0
    %255 = vmatprep.subr.mxu0 0.0
    %256 = vmatpush1.msra.mxu0 0.0
    %257 = vmatprep.subr.mxu0 0.0
    %258 = vmatpush1.msra.mxu0 0.0
    %259 = vmatprep.subr.mxu0 0.0
    %260 = vmatpush1.msra.mxu0 0.0
    %261 = vmatprep.subr.mxu0 0.0
    %262 = vmatpush1.msra.mxu0 0.0
    %263 = vmatprep.subr.mxu0 0.0
    %264 = vmatpush1.msra.mxu0 %v41
    %265 = vmatprep.subr.mxu0 0.0
    %266 = vmatpush1.msra.mxu0 %v40
    %267 = vmatprep.subr.mxu0 0.0
    %268 = vmatpush1.msra.mxu0 %v39
    %269 = vmatprep.subr.mxu0 0.0
    %270 = vmatpush1.msra.mxu0 %v38
    %271 = vmatprep.subr.mxu0 0.0
    %272 = vmatpush2.msra.mxu0 0.0
    %273 = vmatprep.subr.mxu0 0.0
    %274 = vmatpush2.msra.mxu0 0.0
    %275 = vmatprep.subr.mxu0 0.0
    %276 = vmatpush2.msra.mxu0 0.0
    %277 = vmatprep.subr.mxu0 0.0
    %278 = vmatpush2.msra.mxu0 0.0
    %279 = vmatprep.subr.mxu0 0.0
    %280 = vmatpush2.msra.mxu0 0.0
    %281 = vmatprep.subr.mxu0 0.0
    %282 = vmatpush2.msra.mxu0 0.0
    %283 = vmatprep.subr.mxu0 0.0
    %284 = vmatpush2.msra.mxu0 0.0
    %285 = vmatprep.subr.mxu0 0.0
    %286 = vmatpush2.msra.mxu0 0.0
    %287 = vmatprep.subr.mxu0 0.0
    %288 = vmatpush2.msra.mxu0 0.0
    %289 = vmatprep.subr.mxu0 0.0
    %290 = vmatpush2.msra.mxu0 0.0
    %291 = vmatprep.subr.mxu0 0.0
    %292 = vmatpush2.msra.mxu0 0.0
    %293 = vmatprep.subr.mxu0 0.0
    %294 = vmatpush2.msra.mxu0 0.0
    %295 = vmatprep.subr.mxu0 0.0
    %296 = vmatpush2.msra.mxu0 0.0
    %297 = vmatprep.subr.mxu0 0.0
    %298 = vmatpush2.msra.mxu0 0.0
    %299 = vmatprep.subr.mxu0 0.0
    %300 = vmatpush2.msra.mxu0 0.0
    %301 = vmatprep.subr.mxu0 0.0
    %302 = vmatpush2.msra.mxu0 0.0
    %303 = vmatprep.mubr.f32.mxu0 0.0
    %304 = vmatmul.mubr.f32.gmra.mxu0 %v237
    %v305 = vpop.f32.mrf.mxu0
    %v306 = vadd.f32 0.0, %v305
    %v307 = vpop.f32.mrf.mxu0
    %308 = vdwg.mxu0
    %v310 = vrot.slane %v306, 6
    %v312 = vadd.f32 %v127, %v310
    %v313 = vxor.u32 %v312, 2147483648
    %v314 = vmul.f32 %v313, 1.442695
    %v315 = vpow.pop %v314
    %v316 = vadd.f32 %v315, 1.0
    %v317 = vrcp.pop %v316
    %v318 = vmul.f32 1.0, %v317
    %v319 = vtanh.pop %v312
    %v321 = vrot.slane %v227, 6
    %v323 = vmul.f32 %v318, %v321
    %325 = vrot.lane.b32.xlu0 %v319, 64
    %v326 = vpop.permute.xlu0 %325
    %v328 = vmul.f32 %v318, %v326
    %330 = vrot.lane.b32.xlu0 %v328, 32
    %v331 = vpop.permute.xlu0 %330
    %v333 = vadd.f32 %v323, %v331
    %v334 = vtanh.pop %v333
    %336 = vrot.lane.b32.xlu0 %v334, 64
    %v337 = vpop.permute.xlu0 %336
    %v339 = vmul.f32 %v318, %v337
    %v341 = vrot.slane %v339, 2
    %342 = vrot.lane.b32.xlu0 %v341, 32
    %v343 = vpop.permute.xlu0 %342
    %v344 = vsel %vm135, %v343, 0
    %346 = vmatprep.subr.mxu0 0.0
    %347 = vmatpush1.msra.mxu0 0.0
    %348 = vmatprep.subr.mxu0 0.0
    %349 = vmatpush1.msra.mxu0 0.0
    %350 = vmatprep.subr.mxu0 0.0
    %351 = vmatpush1.msra.mxu0 0.0
    %352 = vmatprep.subr.mxu0 0.0
    %353 = vmatpush1.msra.mxu0 0.0
    %354 = vmatprep.subr.mxu0 0.0
    %355 = vmatpush1.msra.mxu0 0.0
    %356 = vmatprep.subr.mxu0 0.0
    %357 = vmatpush1.msra.mxu0 0.0
    %358 = vmatprep.subr.mxu0 0.0
    %359 = vmatpush1.msra.mxu0 0.0
    %360 = vmatprep.subr.mxu0 0.0
    %361 = vmatpush1.msra.mxu0 0.0
    %362 = vmatprep.subr.mxu0 0.0
    %363 = vmatpush1.msra.mxu0 0.0
    %364 = vmatprep.subr.mxu0 0.0
    %365 = vmatpush1.msra.mxu0 0.0
    %366 = vmatprep.subr.mxu0 0.0
    %367 = vmatpush1.msra.mxu0 0.0
    %368 = vmatprep.subr.mxu0 0.0
    %369 = vmatpush1.msra.mxu0 0.0
    %370 = vmatprep.subr.mxu0 0.0
    %371 = vmatpush1.msra.mxu0 %v41
    %372 = vmatprep.subr.mxu0 0.0
    %373 = vmatpush1.msra.mxu0 %v40
    %374 = vmatprep.subr.mxu0 0.0
    %375 = vmatpush1.msra.mxu0 %v39
    %376 = vmatprep.subr.mxu0 0.0
    %377 = vmatpush1.msra.mxu0 %v38
    %378 = vmatprep.subr.mxu0 0.0
    %379 = vmatpush2.msra.mxu0 0.0
    %380 = vmatprep.subr.mxu0 0.0
    %381 = vmatpush2.msra.mxu0 0.0
    %382 = vmatprep.subr.mxu0 0.0
    %383 = vmatpush2.msra.mxu0 0.0
    %384 = vmatprep.subr.mxu0 0.0
    %385 = vmatpush2.msra.mxu0 0.0
    %386 = vmatprep.subr.mxu0 0.0
    %387 = vmatpush2.msra.mxu0 0.0
    %388 = vmatprep.subr.mxu0 0.0
    %389 = vmatpush2.msra.mxu0 0.0
    %390 = vmatprep.subr.mxu0 0.0
    %391 = vmatpush2.msra.mxu0 0.0
    %392 = vmatprep.subr.mxu0 0.0
    %393 = vmatpush2.msra.mxu0 0.0
    %394 = vmatprep.subr.mxu0 0.0
    %395 = vmatpush2.msra.mxu0 0.0
    %396 = vmatprep.subr.mxu0 0.0
    %397 = vmatpush2.msra.mxu0 0.0
    %398 = vmatprep.subr.mxu0 0.0
    %399 = vmatpush2.msra.mxu0 0.0
    %400 = vmatprep.subr.mxu0 0.0
    %401 = vmatpush2.msra.mxu0 0.0
    %402 = vmatprep.subr.mxu0 0.0
    %403 = vmatpush2.msra.mxu0 0.0
    %404 = vmatprep.subr.mxu0 0.0
    %405 = vmatpush2.msra.mxu0 0.0
    %406 = vmatprep.subr.mxu0 0.0
    %407 = vmatpush2.msra.mxu0 0.0
    %408 = vmatprep.subr.mxu0 0.0
    %409 = vmatpush2.msra.mxu0 0.0
    %410 = vmatprep.mubr.f32.mxu0 0.0
    %411 = vmatmul.mubr.f32.gmra.mxu0 %v344
    %v412 = vpop.f32.mrf.mxu0
    %v413 = vadd.f32 0.0, %v412
    %v414 = vpop.f32.mrf.mxu0
    %415 = vdwg.mxu0
    %v417 = vrot.slane %v413, 4
    %v419 = vadd.f32 %v127, %v417
    %v420 = vxor.u32 %v419, 2147483648
    %v421 = vmul.f32 %v420, 1.442695
    %v422 = vpow.pop %v421
    %v423 = vadd.f32 %v422, 1.0
    %v424 = vrcp.pop %v423
    %v425 = vmul.f32 1.0, %v424
    %v426 = vtanh.pop %v419
    %v428 = vrot.slane %v333, 6
    %v430 = vmul.f32 %v425, %v428
    %432 = vrot.lane.b32.xlu0 %v426, 64
    %v433 = vpop.permute.xlu0 %432
    %v435 = vmul.f32 %v425, %v433
    %437 = vrot.lane.b32.xlu0 %v435, 32
    %v438 = vpop.permute.xlu0 %437
    %v440 = vadd.f32 %v430, %v438
    %v441 = vtanh.pop %v440
    %443 = vrot.lane.b32.xlu0 %v441, 64
    %v444 = vpop.permute.xlu0 %443
    %v446 = vmul.f32 %v425, %v444
    %v448 = vrot.slane %v446, 4
    %449 = vrot.lane.b32.xlu0 %v448, 32
    %v450 = vpop.permute.xlu0 %449
    %v451 = vsel %vm135, %v450, 0
    %453 = vmatprep.subr.mxu0 0.0
    %454 = vmatpush1.msra.mxu0 0.0
    %455 = vmatprep.subr.mxu0 0.0
    %456 = vmatpush1.msra.mxu0 0.0
    %457 = vmatprep.subr.mxu0 0.0
    %458 = vmatpush1.msra.mxu0 0.0
    %459 = vmatprep.subr.mxu0 0.0
    %460 = vmatpush1.msra.mxu0 0.0
    %461 = vmatprep.subr.mxu0 0.0
    %462 = vmatpush1.msra.mxu0 0.0
    %463 = vmatprep.subr.mxu0 0.0
    %464 = vmatpush1.msra.mxu0 0.0
    %465 = vmatprep.subr.mxu0 0.0
    %466 = vmatpush1.msra.mxu0 0.0
    %467 = vmatprep.subr.mxu0 0.0
    %468 = vmatpush1.msra.mxu0 0.0
    %469 = vmatprep.subr.mxu0 0.0
    %470 = vmatpush1.msra.mxu0 0.0
    %471 = vmatprep.subr.mxu0 0.0
    %472 = vmatpush1.msra.mxu0 0.0
    %473 = vmatprep.subr.mxu0 0.0
    %474 = vmatpush1.msra.mxu0 0.0
    %475 = vmatprep.subr.mxu0 0.0
    %476 = vmatpush1.msra.mxu0 0.0
    %477 = vmatprep.subr.mxu0 0.0
    %478 = vmatpush1.msra.mxu0 %v41
    %479 = vmatprep.subr.mxu0 0.0
    %480 = vmatpush1.msra.mxu0 %v40
    %481 = vmatprep.subr.mxu0 0.0
    %482 = vmatpush1.msra.mxu0 %v39
    %483 = vmatprep.subr.mxu0 0.0
    %484 = vmatpush1.msra.mxu0 %v38
    %485 = vmatprep.subr.mxu0 0.0
    %486 = vmatpush2.msra.mxu0 0.0
    %487 = vmatprep.subr.mxu0 0.0
    %488 = vmatpush2.msra.mxu0 0.0
    %489 = vmatprep.subr.mxu0 0.0
    %490 = vmatpush2.msra.mxu0 0.0
    %491 = vmatprep.subr.mxu0 0.0
    %492 = vmatpush2.msra.mxu0 0.0
    %493 = vmatprep.subr.mxu0 0.0
    %494 = vmatpush2.msra.mxu0 0.0
    %495 = vmatprep.subr.mxu0 0.0
    %496 = vmatpush2.msra.mxu0 0.0
    %497 = vmatprep.subr.mxu0 0.0
    %498 = vmatpush2.msra.mxu0 0.0
    %499 = vmatprep.subr.mxu0 0.0
    %500 = vmatpush2.msra.mxu0 0.0
    %501 = vmatprep.subr.mxu0 0.0
    %502 = vmatpush2.msra.mxu0 0.0
    %503 = vmatprep.subr.mxu0 0.0
    %504 = vmatpush2.msra.mxu0 0.0
    %505 = vmatprep.subr.mxu0 0.0
    %506 = vmatpush2.msra.mxu0 0.0
    %507 = vmatprep.subr.mxu0 0.0
    %508 = vmatpush2.msra.mxu0 0.0
    %509 = vmatprep.subr.mxu0 0.0
    %510 = vmatpush2.msra.mxu0 0.0
    %511 = vmatprep.subr.mxu0 0.0
    %512 = vmatpush2.msra.mxu0 0.0
    %513 = vmatprep.subr.mxu0 0.0
    %514 = vmatpush2.msra.mxu0 0.0
    %515 = vmatprep.subr.mxu0 0.0
    %516 = vmatpush2.msra.mxu0 0.0
    %517 = vmatprep.mubr.f32.mxu0 0.0
    %518 = vmatmul.mubr.f32.gmra.mxu0 %v451
    %v519 = vpop.f32.mrf.mxu0
    %v520 = vadd.f32 0.0, %v519
    %v521 = vpop.f32.mrf.mxu0
    %522 = vdwg.mxu0
    %v524 = vrot.slane %v520, 2
    %v526 = vadd.f32 %v127, %v524
    %v527 = vxor.u32 %v526, 2147483648
    %v528 = vmul.f32 %v527, 1.442695
    %v529 = vpow.pop %v528
    %v530 = vadd.f32 %v529, 1.0
    %v531 = vrcp.pop %v530
    %v532 = vmul.f32 1.0, %v531
    %v533 = vtanh.pop %v526
    %v535 = vrot.slane %v440, 6
    %v537 = vmul.f32 %v532, %v535
    %539 = vrot.lane.b32.xlu0 %v533, 64
    %v540 = vpop.permute.xlu0 %539
    %v542 = vmul.f32 %v532, %v540
    %544 = vrot.lane.b32.xlu0 %v542, 32
    %v545 = vpop.permute.xlu0 %544
    %v547 = vadd.f32 %v537, %v545
    %v548 = vtanh.pop %v547
    %550 = vrot.lane.b32.xlu0 %v548, 64
    %v551 = vpop.permute.xlu0 %550
    %v553 = vmul.f32 %v532, %v551
    %v555 = vrot.slane %v553, 6
    %556 = vrot.lane.b32.xlu0 %v555, 32
    %v557 = vpop.permute.xlu0 %556
    %v558 = vsel %vm135, %v557, 0
    %560 = vmatprep.subr.mxu0 0.0
    %561 = vmatpush1.msra.mxu0 0.0
    %562 = vmatprep.subr.mxu0 0.0
    %563 = vmatpush1.msra.mxu0 0.0
    %564 = vmatprep.subr.mxu0 0.0
    %565 = vmatpush1.msra.mxu0 0.0
    %566 = vmatprep.subr.mxu0 0.0
    %567 = vmatpush1.msra.mxu0 0.0
    %568 = vmatprep.subr.mxu0 0.0
    %569 = vmatpush1.msra.mxu0 0.0
    %570 = vmatprep.subr.mxu0 0.0
    %571 = vmatpush1.msra.mxu0 0.0
    %572 = vmatprep.subr.mxu0 0.0
    %573 = vmatpush1.msra.mxu0 0.0
    %574 = vmatprep.subr.mxu0 0.0
    %575 = vmatpush1.msra.mxu0 0.0
    %576 = vmatprep.subr.mxu0 0.0
    %577 = vmatpush1.msra.mxu0 0.0
    %578 = vmatprep.subr.mxu0 0.0
    %579 = vmatpush1.msra.mxu0 0.0
    %580 = vmatprep.subr.mxu0 0.0
    %581 = vmatpush1.msra.mxu0 0.0
    %582 = vmatprep.subr.mxu0 0.0
    %583 = vmatpush1.msra.mxu0 0.0
    %584 = vmatprep.subr.mxu0 0.0
    %585 = vmatpush1.msra.mxu0 %v41
    %586 = vmatprep.subr.mxu0 0.0
    %587 = vmatpush1.msra.mxu0 %v40
    %588 = vmatprep.subr.mxu0 0.0
    %589 = vmatpush1.msra.mxu0 %v39
    %590 = vmatprep.subr.mxu0 0.0
    %591 = vmatpush1.msra.mxu0 %v38
    %592 = vmatprep.subr.mxu0 0.0
    %593 = vmatpush2.msra.mxu0 0.0
    %594 = vmatprep.subr.mxu0 0.0
    %595 = vmatpush2.msra.mxu0 0.0
    %596 = vmatprep.subr.mxu0 0.0
    %597 = vmatpush2.msra.mxu0 0.0
    %598 = vmatprep.subr.mxu0 0.0
    %599 = vmatpush2.msra.mxu0 0.0
    %600 = vmatprep.subr.mxu0 0.0
    %601 = vmatpush2.msra.mxu0 0.0
    %602 = vmatprep.subr.mxu0 0.0
    %603 = vmatpush2.msra.mxu0 0.0
    %604 = vmatprep.subr.mxu0 0.0
    %605 = vmatpush2.msra.mxu0 0.0
    %606 = vmatprep.subr.mxu0 0.0
    %607 = vmatpush2.msra.mxu0 0.0
    %608 = vmatprep.subr.mxu0 0.0
    %609 = vmatpush2.msra.mxu0 0.0
    %610 = vmatprep.subr.mxu0 0.0
    %611 = vmatpush2.msra.mxu0 0.0
    %612 = vmatprep.subr.mxu0 0.0
    %613 = vmatpush2.msra.mxu0 0.0
    %614 = vmatprep.subr.mxu0 0.0
    %615 = vmatpush2.msra.mxu0 0.0
    %616 = vmatprep.subr.mxu0 0.0
    %617 = vmatpush2.msra.mxu0 0.0
    %618 = vmatprep.subr.mxu0 0.0
    %619 = vmatpush2.msra.mxu0 0.0
    %620 = vmatprep.subr.mxu0 0.0
    %621 = vmatpush2.msra.mxu0 0.0
    %622 = vmatprep.subr.mxu0 0.0
    %623 = vmatpush2.msra.mxu0 0.0
    %624 = vmatprep.mubr.f32.mxu0 0.0
    %625 = vmatmul.mubr.f32.gmra.mxu0 %v558
    %v626 = vpop.f32.mrf.mxu0
    %v627 = vadd.f32 0.0, %v626
    %v628 = vpop.f32.mrf.mxu0
    %629 = vdwg.mxu0
    %v630 = vadd.f32 %v132, %v627
    %v631 = vxor.u32 %v630, 2147483648
    %v632 = vmul.f32 %v631, 1.442695
    %v633 = vpow.pop %v632
    %v634 = vadd.f32 %v633, 1.0
    %v635 = vrcp.pop %v634
    %v636 = vmul.f32 1.0, %v635
    %v637 = vtanh.pop %v630
    %v639 = vrot.slane %v547, 6
    %v641 = vmul.f32 %v636, %v639
    %643 = vrot.lane.b32.xlu0 %v637, 64
    %v644 = vpop.permute.xlu0 %643
    %v646 = vmul.f32 %v636, %v644
    %648 = vrot.lane.b32.xlu0 %v646, 32
    %v649 = vpop.permute.xlu0 %648
    %v651 = vadd.f32 %v641, %v649
    %v652 = vtanh.pop %v651
    %654 = vrot.lane.b32.xlu0 %v652, 64
    %v655 = vpop.permute.xlu0 %654
    %v657 = vmul.f32 %v636, %v655
    %659 = vrot.lane.b32.xlu0 %v657, 32
    %v660 = vpop.permute.xlu0 %659
    %v661 = vsel %vm135, %v660, 0
    %663 = vmatprep.subr.mxu0 0.0
    %664 = vmatpush1.msra.mxu0 0.0
    %665 = vmatprep.subr.mxu0 0.0
    %666 = vmatpush1.msra.mxu0 0.0
    %667 = vmatprep.subr.mxu0 0.0
    %668 = vmatpush1.msra.mxu0 0.0
    %669 = vmatprep.subr.mxu0 0.0
    %670 = vmatpush1.msra.mxu0 0.0
    %671 = vmatprep.subr.mxu0 0.0
    %672 = vmatpush1.msra.mxu0 0.0
    %673 = vmatprep.subr.mxu0 0.0
    %674 = vmatpush1.msra.mxu0 0.0
    %675 = vmatprep.subr.mxu0 0.0
    %676 = vmatpush1.msra.mxu0 0.0
    %677 = vmatprep.subr.mxu0 0.0
    %678 = vmatpush1.msra.mxu0 0.0
    %679 = vmatprep.subr.mxu0 0.0
    %680 = vmatpush1.msra.mxu0 0.0
    %681 = vmatprep.subr.mxu0 0.0
    %682 = vmatpush1.msra.mxu0 0.0
    %683 = vmatprep.subr.mxu0 0.0
    %684 = vmatpush1.msra.mxu0 0.0
    %685 = vmatprep.subr.mxu0 0.0
    %686 = vmatpush1.msra.mxu0 0.0
    %687 = vmatprep.subr.mxu0 0.0
    %688 = vmatpush1.msra.mxu0 %v41
    %689 = vmatprep.subr.mxu0 0.0
    %690 = vmatpush1.msra.mxu0 %v40
    %691 = vmatprep.subr.mxu0 0.0
    %692 = vmatpush1.msra.mxu0 %v39
    %693 = vmatprep.subr.mxu0 0.0
    %694 = vmatpush1.msra.mxu0 %v38
    %695 = vmatprep.subr.mxu0 0.0
    %696 = vmatpush2.msra.mxu0 0.0
    %697 = vmatprep.subr.mxu0 0.0
    %698 = vmatpush2.msra.mxu0 0.0
    %699 = vmatprep.subr.mxu0 0.0
    %700 = vmatpush2.msra.mxu0 0.0
    %701 = vmatprep.subr.mxu0 0.0
    %702 = vmatpush2.msra.mxu0 0.0
    %703 = vmatprep.subr.mxu0 0.0
    %704 = vmatpush2.msra.mxu0 0.0
    %705 = vmatprep.subr.mxu0 0.0
    %706 = vmatpush2.msra.mxu0 0.0
    %707 = vmatprep.subr.mxu0 0.0
    %708 = vmatpush2.msra.mxu0 0.0
    %709 = vmatprep.subr.mxu0 0.0
    %710 = vmatpush2.msra.mxu0 0.0
    %711 = vmatprep.subr.mxu0 0.0
    %712 = vmatpush2.msra.mxu0 0.0
    %713 = vmatprep.subr.mxu0 0.0
    %714 = vmatpush2.msra.mxu0 0.0
    %715 = vmatprep.subr.mxu0 0.0
    %716 = vmatpush2.msra.mxu0 0.0
    %717 = vmatprep.subr.mxu0 0.0
    %718 = vmatpush2.msra.mxu0 0.0
    %719 = vmatprep.subr.mxu0 0.0
    %720 = vmatpush2.msra.mxu0 0.0
    %721 = vmatprep.subr.mxu0 0.0
    %722 = vmatpush2.msra.mxu0 0.0
    %723 = vmatprep.subr.mxu0 0.0
    %724 = vmatpush2.msra.mxu0 0.0
    %725 = vmatprep.subr.mxu0 0.0
    %726 = vmatpush2.msra.mxu0 0.0
    %727 = vmatprep.mubr.f32.mxu0 0.0
    %728 = vmatmul.mubr.f32.gmra.mxu0 %v661
    %v729 = vpop.f32.mrf.mxu0
    %v730 = vadd.f32 0.0, %v729
    %v731 = vpop.f32.mrf.mxu0
    %732 = vdwg.mxu0
    %v734 = vrot.slane %v730, 6
    %v736 = vadd.f32 %v132, %v734
    %v737 = vxor.u32 %v736, 2147483648
    %v738 = vmul.f32 %v737, 1.442695
    %v739 = vpow.pop %v738
    %v740 = vadd.f32 %v739, 1.0
    %v741 = vrcp.pop %v740
    %v742 = vmul.f32 1.0, %v741
    %v743 = vtanh.pop %v736
    %v745 = vrot.slane %v651, 6
    %v747 = vmul.f32 %v742, %v745
    %749 = vrot.lane.b32.xlu0 %v743, 64
    %v750 = vpop.permute.xlu0 %749
    %v752 = vmul.f32 %v742, %v750
    %754 = vrot.lane.b32.xlu0 %v752, 32
    %v755 = vpop.permute.xlu0 %754
    %v757 = vadd.f32 %v747, %v755
    %v758 = vtanh.pop %v757
    %760 = vrot.lane.b32.xlu0 %v758, 64
    %v761 = vpop.permute.xlu0 %760
    %v763 = vmul.f32 %v742, %v761
    %v765 = vrot.slane %v763, 2
    %766 = vrot.lane.b32.xlu0 %v765, 32
    %v767 = vpop.permute.xlu0 %766
    %v768 = vsel %vm135, %v767, 0
    %770 = vmatprep.subr.mxu0 0.0
    %771 = vmatpush1.msra.mxu0 0.0
    %772 = vmatprep.subr.mxu0 0.0
    %773 = vmatpush1.msra.mxu0 0.0
    %774 = vmatprep.subr.mxu0 0.0
    %775 = vmatpush1.msra.mxu0 0.0
    %776 = vmatprep.subr.mxu0 0.0
    %777 = vmatpush1.msra.mxu0 0.0
    %778 = vmatprep.subr.mxu0 0.0
    %779 = vmatpush1.msra.mxu0 0.0
    %780 = vmatprep.subr.mxu0 0.0
    %781 = vmatpush1.msra.mxu0 0.0
    %782 = vmatprep.subr.mxu0 0.0
    %783 = vmatpush1.msra.mxu0 0.0
    %784 = vmatprep.subr.mxu0 0.0
    %785 = vmatpush1.msra.mxu0 0.0
    %786 = vmatprep.subr.mxu0 0.0
    %787 = vmatpush1.msra.mxu0 0.0
    %788 = vmatprep.subr.mxu0 0.0
    %789 = vmatpush1.msra.mxu0 0.0
    %790 = vmatprep.subr.mxu0 0.0
    %791 = vmatpush1.msra.mxu0 0.0
    %792 = vmatprep.subr.mxu0 0.0
    %793 = vmatpush1.msra.mxu0 0.0
    %794 = vmatprep.subr.mxu0 0.0
    %795 = vmatpush1.msra.mxu0 %v41
    %796 = vmatprep.subr.mxu0 0.0
    %797 = vmatpush1.msra.mxu0 %v40
    %798 = vmatprep.subr.mxu0 0.0
    %799 = vmatpush1.msra.mxu0 %v39
    %800 = vmatprep.subr.mxu0 0.0
    %801 = vmatpush1.msra.mxu0 %v38
    %802 = vmatprep.subr.mxu0 0.0
    %803 = vmatpush2.msra.mxu0 0.0
    %804 = vmatprep.subr.mxu0 0.0
    %805 = vmatpush2.msra.mxu0 0.0
    %806 = vmatprep.subr.mxu0 0.0
    %807 = vmatpush2.msra.mxu0 0.0
    %808 = vmatprep.subr.mxu0 0.0
    %809 = vmatpush2.msra.mxu0 0.0
    %810 = vmatprep.subr.mxu0 0.0
    %811 = vmatpush2.msra.mxu0 0.0
    %812 = vmatprep.subr.mxu0 0.0
    %813 = vmatpush2.msra.mxu0 0.0
    %814 = vmatprep.subr.mxu0 0.0
    %815 = vmatpush2.msra.mxu0 0.0
    %816 = vmatprep.subr.mxu0 0.0
    %817 = vmatpush2.msra.mxu0 0.0
    %818 = vmatprep.subr.mxu0 0.0
    %819 = vmatpush2.msra.mxu0 0.0
    %820 = vmatprep.subr.mxu0 0.0
    %821 = vmatpush2.msra.mxu0 0.0
    %822 = vmatprep.subr.mxu0 0.0
    %823 = vmatpush2.msra.mxu0 0.0
    %824 = vmatprep.subr.mxu0 0.0
    %825 = vmatpush2.msra.mxu0 0.0
    %826 = vmatprep.subr.mxu0 0.0
    %827 = vmatpush2.msra.mxu0 0.0
    %828 = vmatprep.subr.mxu0 0.0
    %829 = vmatpush2.msra.mxu0 0.0
    %830 = vmatprep.subr.mxu0 0.0
    %831 = vmatpush2.msra.mxu0 0.0
    %832 = vmatprep.subr.mxu0 0.0
    %833 = vmatpush2.msra.mxu0 0.0
    %834 = vmatprep.mubr.f32.mxu0 0.0
    %835 = vmatmul.mubr.f32.gmra.mxu0 %v768
    %v836 = vpop.f32.mrf.mxu0
    %v837 = vadd.f32 0.0, %v836
    %v838 = vpop.f32.mrf.mxu0
    %839 = vdwg.mxu0
    %v841 = vrot.slane %v837, 4
    %v843 = vadd.f32 %v132, %v841
    %v844 = vxor.u32 %v843, 2147483648
    %v845 = vmul.f32 %v844, 1.442695
    %v846 = vpow.pop %v845
    %v847 = vadd.f32 %v846, 1.0
    %v848 = vrcp.pop %v847
    %v849 = vmul.f32 1.0, %v848
    %v850 = vtanh.pop %v843
    %v852 = vrot.slane %v757, 6
    %v854 = vmul.f32 %v849, %v852
    %856 = vrot.lane.b32.xlu0 %v850, 64
    %v857 = vpop.permute.xlu0 %856
    %v859 = vmul.f32 %v849, %v857
    %861 = vrot.lane.b32.xlu0 %v859, 32
    %v862 = vpop.permute.xlu0 %861
    %v864 = vadd.f32 %v854, %v862
    %v865 = vtanh.pop %v864
    %867 = vrot.lane.b32.xlu0 %v865, 64
    %v868 = vpop.permute.xlu0 %867
    %v870 = vmul.f32 %v849, %v868
    %v872 = vrot.slane %v870, 4
    %873 = vrot.lane.b32.xlu0 %v872, 32
    %v874 = vpop.permute.xlu0 %873
    %v875 = vsel %vm135, %v874, 0
    %877 = vmatprep.subr.mxu0 0.0
    %878 = vmatpush1.msra.mxu0 0.0
    %879 = vmatprep.subr.mxu0 0.0
    %880 = vmatpush1.msra.mxu0 0.0
    %881 = vmatprep.subr.mxu0 0.0
    %882 = vmatpush1.msra.mxu0 0.0
    %883 = vmatprep.subr.mxu0 0.0
    %884 = vmatpush1.msra.mxu0 0.0
    %885 = vmatprep.subr.mxu0 0.0
    %886 = vmatpush1.msra.mxu0 0.0
    %887 = vmatprep.subr.mxu0 0.0
    %888 = vmatpush1.msra.mxu0 0.0
    %889 = vmatprep.subr.mxu0 0.0
    %890 = vmatpush1.msra.mxu0 0.0
    %891 = vmatprep.subr.mxu0 0.0
    %892 = vmatpush1.msra.mxu0 0.0
    %893 = vmatprep.subr.mxu0 0.0
    %894 = vmatpush1.msra.mxu0 0.0
    %895 = vmatprep.subr.mxu0 0.0
    %896 = vmatpush1.msra.mxu0 0.0
    %897 = vmatprep.subr.mxu0 0.0
    %898 = vmatpush1.msra.mxu0 0.0
    %899 = vmatprep.subr.mxu0 0.0
    %900 = vmatpush1.msra.mxu0 0.0
    %901 = vmatprep.subr.mxu0 0.0
    %902 = vmatpush1.msra.mxu0 %v41
    %903 = vmatprep.subr.mxu0 0.0
    %904 = vmatpush1.msra.mxu0 %v40
    %905 = vmatprep.subr.mxu0 0.0
    %906 = vmatpush1.msra.mxu0 %v39
    %907 = vmatprep.subr.mxu0 0.0
    %908 = vmatpush1.msra.mxu0 %v38
    %909 = vmatprep.subr.mxu0 0.0
    %910 = vmatpush2.msra.mxu0 0.0
    %911 = vmatprep.subr.mxu0 0.0
    %912 = vmatpush2.msra.mxu0 0.0
    %913 = vmatprep.subr.mxu0 0.0
    %914 = vmatpush2.msra.mxu0 0.0
    %915 = vmatprep.subr.mxu0 0.0
    %916 = vmatpush2.msra.mxu0 0.0
    %917 = vmatprep.subr.mxu0 0.0
    %918 = vmatpush2.msra.mxu0 0.0
    %919 = vmatprep.subr.mxu0 0.0
    %920 = vmatpush2.msra.mxu0 0.0
    %921 = vmatprep.subr.mxu0 0.0
    %922 = vmatpush2.msra.mxu0 0.0
    %923 = vmatprep.subr.mxu0 0.0
    %924 = vmatpush2.msra.mxu0 0.0
    %925 = vmatprep.subr.mxu0 0.0
    %926 = vmatpush2.msra.mxu0 0.0
    %927 = vmatprep.subr.mxu0 0.0
    %928 = vmatpush2.msra.mxu0 0.0
    %929 = vmatprep.subr.mxu0 0.0
    %930 = vmatpush2.msra.mxu0 0.0
    %931 = vmatprep.subr.mxu0 0.0
    %932 = vmatpush2.msra.mxu0 0.0
    %933 = vmatprep.subr.mxu0 0.0
    %934 = vmatpush2.msra.mxu0 0.0
    %935 = vmatprep.subr.mxu0 0.0
    %936 = vmatpush2.msra.mxu0 0.0
    %937 = vmatprep.subr.mxu0 0.0
    %938 = vmatpush2.msra.mxu0 0.0
    %939 = vmatprep.subr.mxu0 0.0
    %940 = vmatpush2.msra.mxu0 0.0
    %941 = vmatprep.mubr.f32.mxu0 0.0
    %942 = vmatmul.mubr.f32.gmra.mxu0 %v875
    %v943 = vpop.f32.mrf.mxu0
    %v944 = vadd.f32 0.0, %v943
    %v945 = vpop.f32.mrf.mxu0
    %946 = vdwg.mxu0
    %v948 = vrot.slane %v944, 2
    %v950 = vadd.f32 %v132, %v948
    %v951 = vxor.u32 %v950, 2147483648
    %v952 = vmul.f32 %v951, 1.442695
    %v953 = vpow.pop %v952
    %v954 = vadd.f32 %v953, 1.0
    %v955 = vrcp.pop %v954
    %v956 = vmul.f32 1.0, %v955
    %v957 = vtanh.pop %v950
    %v959 = vrot.slane %v864, 6
    %v961 = vmul.f32 %v956, %v959
    %963 = vrot.lane.b32.xlu0 %v957, 64
    %v964 = vpop.permute.xlu0 %963
    %v966 = vmul.f32 %v956, %v964
    %968 = vrot.lane.b32.xlu0 %v966, 32
    %v969 = vpop.permute.xlu0 %968
    %v971 = vadd.f32 %v961, %v969
    %v972 = vtanh.pop %v971
    %974 = vrot.lane.b32.xlu0 %v972, 64
    %v975 = vpop.permute.xlu0 %974
    %v977 = vmul.f32 %v956, %v975
    %v978 = vld [vmem:[%s4] sm:$0xff]
    %v979 = vld [vmem:[%s4 + $0x8] sm:$0xff]
    %v980 = vld [vmem:[%s4 + $0x10] sm:$0xff]
    %v981 = vld [vmem:[%s4 + $0x18] sm:$0xff]
    %v982 = vld [vmem:[%s5] sm:$0x1]
    %v984 = vlaneseq
    %v985 = vshrl.u32 %v984, 7
    %v986 = vsub.s32 0, %v985
    %v987 = vrot.slane %v982, %v986
    %v990 = vrot.slane %v977, 6
    %991 = vrot.lane.b32.xlu0 %v990, 32
    %v992 = vpop.permute.xlu0 %991
    %v993 = vsel %vm135, %v992, 0
    %995 = vmatprep.subr.mxu0 0.0
    %996 = vmatpush1.msra.mxu0 0.0
    %997 = vmatprep.subr.mxu0 0.0
    %998 = vmatpush1.msra.mxu0 0.0
    %999 = vmatprep.subr.mxu0 0.0
    %1000 = vmatpush1.msra.mxu0 0.0
    %1001 = vmatprep.subr.mxu0 0.0
    %1002 = vmatpush1.msra.mxu0 0.0
    %1003 = vmatprep.subr.mxu0 0.0
    %1004 = vmatpush1.msra.mxu0 0.0
    %1005 = vmatprep.subr.mxu0 0.0
    %1006 = vmatpush1.msra.mxu0 0.0
    %1007 = vmatprep.subr.mxu0 0.0
    %1008 = vmatpush1.msra.mxu0 0.0
    %1009 = vmatprep.subr.mxu0 0.0
    %1010 = vmatpush1.msra.mxu0 0.0
    %1011 = vmatprep.subr.mxu0 0.0
    %1012 = vmatpush1.msra.mxu0 0.0
    %1013 = vmatprep.subr.mxu0 0.0
    %1014 = vmatpush1.msra.mxu0 0.0
    %1015 = vmatprep.subr.mxu0 0.0
    %1016 = vmatpush1.msra.mxu0 0.0
    %1017 = vmatprep.subr.mxu0 0.0
    %1018 = vmatpush1.msra.mxu0 0.0
    %1019 = vmatprep.subr.mxu0 0.0
    %1020 = vmatpush1.msra.mxu0 %v981
    %1021 = vmatprep.subr.mxu0 0.0
    %1022 = vmatpush1.msra.mxu0 %v980
    %1023 = vmatprep.subr.mxu0 0.0
    %1024 = vmatpush1.msra.mxu0 %v979
    %1025 = vmatprep.subr.mxu0 0.0
    %1026 = vmatpush1.msra.mxu0 %v978
    %1027 = vmatprep.subr.mxu0 0.0
    %1028 = vmatpush2.msra.mxu0 0.0
    %1029 = vmatprep.subr.mxu0 0.0
    %1030 = vmatpush2.msra.mxu0 0.0
    %1031 = vmatprep.subr.mxu0 0.0
    %1032 = vmatpush2.msra.mxu0 0.0
    %1033 = vmatprep.subr.mxu0 0.0
    %1034 = vmatpush2.msra.mxu0 0.0
    %1035 = vmatprep.subr.mxu0 0.0
    %1036 = vmatpush2.msra.mxu0 0.0
    %1037 = vmatprep.subr.mxu0 0.0
    %1038 = vmatpush2.msra.mxu0 0.0
    %1039 = vmatprep.subr.mxu0 0.0
    %1040 = vmatpush2.msra.mxu0 0.0
    %1041 = vmatprep.subr.mxu0 0.0
    %1042 = vmatpush2.msra.mxu0 0.0
    %1043 = vmatprep.subr.mxu0 0.0
    %1044 = vmatpush2.msra.mxu0 0.0
    %1045 = vmatprep.subr.mxu0 0.0
    %1046 = vmatpush2.msra.mxu0 0.0
    %1047 = vmatprep.subr.mxu0 0.0
    %1048 = vmatpush2.msra.mxu0 0.0
    %1049 = vmatprep.subr.mxu0 0.0
    %1050 = vmatpush2.msra.mxu0 0.0
    %1051 = vmatprep.subr.mxu0 0.0
    %1052 = vmatpush2.msra.mxu0 0.0
    %1053 = vmatprep.subr.mxu0 0.0
    %1054 = vmatpush2.msra.mxu0 0.0
    %1055 = vmatprep.subr.mxu0 0.0
    %1056 = vmatpush2.msra.mxu0 0.0
    %1057 = vmatprep.subr.mxu0 0.0
    %1058 = vmatpush2.msra.mxu0 0.0
    %1059 = vmatprep.mubr.f32.mxu0 0.0
    %1060 = vmatmul.mubr.f32.gmra.mxu0 %v993
    %v1061 = vpop.f32.mrf.mxu0
    %v1062 = vadd.f32 %v987, %v1061
    %v1063 = vpop.f32.mrf.mxu0
    %1064 = vdwg.mxu0
    %vm1065 = vcmask 123904
    %1066 = vst.msk [vmem:[#allocation5] sm:$0x3] %vm1065, %v1062
    // Predicated region
    $region30: #{tpu_custom_call.1} parent=1 // pred_check
      _
    $region31: #{tpu_custom_call.1} parent=1 // pred_check_branch
      %1068 = sbr.rel (0) target = $region33
    $region32: #{tpu_custom_call.1} parent=1 // pred_region
      %s1070 = ssub.s32 32, 32
      %1071 = vsyncadd [#allocation4], %s1070
      %s1073 = sshll.u32 [#allocation5], 4
      %s1074 = int_to_ptr.vmem [resolvable:$true] %s1073
      %1076 = dma.vmem_to_hbm [thread:$0]  %s1074, 32, %s6, [#allocation4]
    $region33: #{tpu_custom_call.1} parent=1 // pred_fallthru
      _
    // Predicated region
    $region34: #{tpu_custom_call.1} parent=1 // pred_check
      _
    $region35: #{tpu_custom_call.1} parent=1 // pred_check_branch
      %1078 = sbr.rel (0) target = $region37
    $region36: #{tpu_custom_call.1} parent=1 // pred_region
      %1079 = dma.done [#allocation4], 32
    $region37: #{tpu_custom_call.1} parent=1 // pred_fallthru
      _
    %1080 = vsyncpa [#allocation3], 1
    %1081 = vsyncpa [#allocation4], 1

</llo_original>
